<compile_context>
chip_gen: v5e
topology: v5e:2x2
jax: 0.10.0
libtpu: 0.0.40
codegen_flags: <defaults>
</compile_context>

<pallas_src>
import functools

import jax
import jax.numpy as jnp
from jax.experimental import pallas as pl
from jax.experimental.pallas import tpu as pltpu

LANE = 128           # TPU lane width
SUBLANE_PACK = 16    # bf16 sublane packing granularity
MAX_TILE_B = 8192    # batch-tile cap (footprint-checked against VMEM below)


def _round_up(x, m):
    return (x + m - 1) // m * m


def _use_bf16_epilogue():
    """bf16 cast/ReLU epilogue + MXU head on chips with a packed-bf16 VPU
    (v6e / v7x); keep the f32 epilogue on v5e and older (and unknown)."""
    try:
        kind = jax.devices()[0].device_kind.lower()
    except Exception:
        return False
    if any(t in kind for t in ("v2", "v3", "v4", "v5")):
        return False
    return any(t in kind for t in ("v6", "v7", "7x"))


def _critic_kernel(nout, bf16_epilogue, x_ref, w1_ref, w2_ref, w3_ref, o_ref):
    """Feature-major layout: x_ref is (NIN_P, TILE_B), activations (H, TILE_B).
    Biases are pre-folded into the weights via the 'ones' channel, so there are
    no bias broadcasts/adds in the epilogue."""
    act_dtype = jnp.bfloat16 if bf16_epilogue else jnp.float32

    # layer 1: Linear(+bias folded) -> ReLU  (bf16 MXU operands, f32 accumulate)
    h = jnp.dot(w1_ref[...], x_ref[...], preferred_element_type=jnp.float32)
    h = jnp.maximum(h.astype(act_dtype), 0.0)            # ReLU at act_dtype width

    # layer 2: Linear(+bias folded) -> ReLU
    h = jnp.dot(w2_ref[...], h if bf16_epilogue else h.astype(jnp.bfloat16),
                preferred_element_type=jnp.float32)
    h = jnp.maximum(h.astype(act_dtype), 0.0)

    # layer 3: value head (no activation; b3 folded via the ones channel)
    if nout == 1 and not bf16_epilogue:
        # v5e path: f32 VPU multiply + sublane reduction (activations stay f32)
        v = jnp.sum(h * w3_ref[...], axis=0, keepdims=True)          # (1, TILE_B)
    else:
        # v6e/v7x path: offload the head to the (idle) MXU
        v = jnp.dot(w3_ref[...], h if bf16_epilogue else h.astype(jnp.bfloat16),
                    preferred_element_type=jnp.float32)              # (nout, TILE_B)

    o_ref[0] = v.astype(o_ref.dtype)                                 # lane-dense store


def init_params(key, nin, nout, hid):
    """PyTorch nn.Linear layout/init: W (out, in), b (out,), U(-1/sqrt(fan_in), +)."""
    ks = jax.random.split(key, 6)

    def linear(kw, kb, fan_in, fan_out):
        bound = 1.0 / float(fan_in) ** 0.5
        w = jax.random.uniform(kw, (fan_out, fan_in), jnp.float32, -bound, bound)
        b = jax.random.uniform(kb, (fan_out,), jnp.float32, -bound, bound)
        return w, b

    W1, b1 = linear(ks[0], ks[1], nin, hid)
    W2, b2 = linear(ks[2], ks[3], hid, hid)
    W3, b3 = linear(ks[4], ks[5], hid, nout)
    return {"W1": W1, "b1": b1, "W2": W2, "b2": b2, "W3": W3, "b3": b3}


def prepare_params(params, bf16_epilogue=None):
    """One-time weight prep:
       * pad hid only to the bf16 sublane-pack multiple (with one spare row
         reserved as the constant-'ones' channel),
       * fold b1/b2/b3 into the weight matrices via that ones channel,
       * cast MXU operands to bf16, keep PyTorch (out, in) orientation."""
    if bf16_epilogue is None:
        bf16_epilogue = _use_bf16_epilogue()

    W1, b1 = params["W1"], params["b1"]
    W2, b2 = params["W2"], params["b2"]
    W3, b3 = params["W3"], params["b3"]
    hid, nin = W1.shape
    nout = W3.shape[0]

    H = _round_up(hid + 1, SUBLANE_PACK)      # hidden width incl. ones channel
    ones_row = hid                            # first padded row = ones channel
    nin_p = _round_up(nin + 1, 8)             # input width incl. ones column

    w1 = jnp.zeros((H, nin_p), jnp.float32)
    w1 = w1.at[:hid, :nin].set(W1).at[:hid, nin].set(b1)
    w1 = w1.at[ones_row, nin].set(1.0)        # keep the ones channel alive (ReLU(1)=1)

    w2 = jnp.zeros((H, H), jnp.float32)
    w2 = w2.at[:hid, :hid].set(W2).at[:hid, ones_row].set(b2)
    w2 = w2.at[ones_row, ones_row].set(1.0)   # propagate the ones channel

    if nout == 1 and not bf16_epilogue:
        # f32 column for the VPU multiply+reduce head (v5e); b3 stays exact f32
        w3 = jnp.zeros((H, 1), jnp.float32)
        w3 = w3.at[:hid, 0].set(W3[0]).at[ones_row, 0].set(b3[0])
    else:
        w3 = jnp.zeros((nout, H), jnp.float32)
        w3 = w3.at[:, :hid].set(W3).at[:, ones_row].set(b3)
        w3 = w3.astype(jnp.bfloat16)

    return {
        "w1": w1.astype(jnp.bfloat16),        # (H, nin_p)
        "w2": w2.astype(jnp.bfloat16),        # (H, H)
        "w3": w3,                             # (nout, H) bf16  or  (H, 1) f32
        "H": H, "nin": nin, "nin_p": nin_p, "hid": hid, "nout": nout,
        "bf16_epilogue": bool(bf16_epilogue),
    }


def _tile_footprint_bytes(tile_b, H, nin_p, nout):
    io = nin_p * tile_b * 2 + nout * tile_b * 4            # bf16 in-tile + f32 out-tile
    act = 3 * H * tile_b * 4 + 2 * H * tile_b * 2          # f32 temps + bf16 casts/relayout
    return 2 * io + act                                    # 2x: double-buffered pipeline


def _pick_tile_b(B, H, nin_p, nout):
    # >=2 balanced tiles when the batch is big enough (both v7x TensorCores get
    # work and the last tile isn't mostly padding); shrink if VMEM would blow.
    min_tiles = 2 if B > LANE else 1
    tile_b = min(MAX_TILE_B, _round_up(-(-B // min_tiles), LANE))
    while tile_b > LANE and _tile_footprint_bytes(tile_b, H, nin_p, nout) > (40 << 20):
        tile_b = _round_up(tile_b // 2, LANE)
    return tile_b


def critic_fnn_forward(x, prep):
    """x: (B, nin) float32 -> value (B, nout) float32.  Call under jax.jit so the
    layout plumbing (pad/transpose/cast, output relayout) fuses with the kernel."""
    B, nin = x.shape
    assert nin == prep["nin"]
    H, nin_p, nout = prep["H"], prep["nin_p"], prep["nout"]
    bf16_epilogue = prep["bf16_epilogue"]
    w1, w2, w3 = prep["w1"], prep["w2"], prep["w3"]

    tile_b = _pick_tile_b(B, H, nin_p, nout)
    b_pad = _round_up(B, tile_b)
    num_tiles = b_pad // tile_b

    # Batch-pad, append the constant-ones channel (bias folding), go
    # feature-major (batch on lanes), bf16 operands for the MXU.
    # TODO(synk): callers that already hold x feature-major/bf16 could skip this.
    xt = (jnp.zeros((b_pad, nin_p), x.dtype)
          .at[:B, :nin].set(x)
          .at[:, nin].set(1.0))
    xt = xt.T.astype(jnp.bfloat16)                                   # (nin_p, b_pad)

    w_bytes = sum(int(a.size) * a.dtype.itemsize for a in (w1, w2, w3))
    vmem_limit = int(min(_tile_footprint_bytes(tile_b, H, nin_p, nout)
                         + 2 * w_bytes + (8 << 20), 100 << 20))

    flops = 2 * b_pad * (nin_p * H + H * H + H * nout)
    bytes_accessed = int(xt.size) * 2 + w_bytes + b_pad * nout * 4

    kernel = functools.partial(_critic_kernel, nout, bf16_epilogue)
    out = pl.pallas_call(
        kernel,
        out_shape=jax.ShapeDtypeStruct((num_tiles, nout, tile_b), jnp.float32),
        grid=(num_tiles,),
        in_specs=[
            # x tile: default Buffered(2) is intentional — the DMA is tiny and
            # fully hidden under compute; deeper buffering only spends VMEM.
            pl.BlockSpec((nin_p, tile_b), lambda i: (0, i)),
            pl.BlockSpec(w1.shape, lambda i: (0, 0)),     # weights stay VMEM-resident
            pl.BlockSpec(w2.shape, lambda i: (0, 0)),
            pl.BlockSpec(w3.shape, lambda i: (0, 0)),
        ],
        out_specs=pl.BlockSpec((1, nout, tile_b), lambda i: (i, 0, 0)),
        compiler_params=pltpu.CompilerParams(
            dimension_semantics=("parallel",),            # v7x: shard batch over 2 TCs
            vmem_limit_bytes=vmem_limit,
        ),
        cost_estimate=pl.CostEstimate(
            flops=flops, transcendentals=0, bytes_accessed=bytes_accessed),
    )(xt, w1, w2, w3)

    # (num_tiles, nout, tile_b) -> (B, nout)
    out = jnp.transpose(out, (0, 2, 1)).reshape(b_pad, nout)
    return out[:B]


def reference_forward(x, params):
    """Pure-f32 reference with exact PyTorch nn.Linear semantics."""
    h1 = jnp.maximum(x @ params["W1"].T + params["b1"], 0.0)
    h2 = jnp.maximum(h1 @ params["W2"].T + params["b2"], 0.0)
    return h2 @ params["W3"].T + params["b3"]


if __name__ == "__main__":
    key = jax.random.PRNGKey(0)
    k_param, k_x = jax.random.split(key)

    # Critic_FNN(param=(nin, nout, hid)) at small shapes
    B, nin, nout, hid = 8, 16, 1, 32

    params = init_params(k_param, nin, nout, hid)
    prep = prepare_params(params)
    x = jax.random.normal(k_x, (B, nin), jnp.float32)

    forward = jax.jit(functools.partial(critic_fnn_forward, prep=prep))
    value = forward(x)
    jax.block_until_ready(value)

    ref = reference_forward(x, params)
    assert value.shape == (B, nout), value.shape
    # bf16 MXU operands + bias folding into bf16 weights (f32 accumulate) ->
    # tolerance slightly above f32-exact.
    err = float(jnp.max(jnp.abs(value - ref)))
    assert jnp.allclose(value, ref, atol=5e-2, rtol=5e-2), f"mismatch vs reference: {err}"

    print("KERNEL_OK")
</pallas_src>

<mosaic_0001>
module attributes {stable_mosaic.version = 11 : i64} {
  func.func @_critic_kernel(%arg0: i32, %arg1: memref<24x128xbf16, #tpu.memory_space<vmem>>, %arg2: memref<48x24xbf16, #tpu.memory_space<vmem>>, %arg3: memref<48x48xbf16, #tpu.memory_space<vmem>>, %arg4: memref<48x1xf32, #tpu.memory_space<vmem>>, %arg5: memref<1x1x128xf32, #tpu.memory_space<vmem>>) attributes {dimension_semantics = [#tpu.dimension_semantics<parallel>], iteration_bounds = array<i64: 1>, scalar_prefetch = 0 : i64, scratch_operands = 0 : i64, tpu.core_type = #tpu.core_type<tc>, window_params = [{transform_indices = @transform_0, window_bounds = array<i64: 24, 128>}, {pipeline_mode = #tpu.pipeline_mode<synchronous>, transform_indices = @transform_1, window_bounds = array<i64: 48, 24>}, {pipeline_mode = #tpu.pipeline_mode<synchronous>, transform_indices = @transform_2, window_bounds = array<i64: 48, 48>}, {pipeline_mode = #tpu.pipeline_mode<synchronous>, transform_indices = @transform_3, window_bounds = array<i64: 48, 1>}, {transform_indices = @transform_4, window_bounds = array<i64: 1, 1, 128>}]} {
    %c0 = arith.constant 0 : index
    %c0_0 = arith.constant 0 : index
    %0 = vector.load %arg2[%c0, %c0_0] : memref<48x24xbf16, #tpu.memory_space<vmem>>, vector<48x24xbf16>
    %c0_1 = arith.constant 0 : index
    %c0_2 = arith.constant 0 : index
    %1 = vector.load %arg1[%c0_1, %c0_2] : memref<24x128xbf16, #tpu.memory_space<vmem>>, vector<24x128xbf16>
    %cst = arith.constant dense<0.000000e+00> : vector<48x128xf32>
    %2 = tpu.matmul %0, %1, %cst {dimension_numbers = #tpu.dot_dimension_numbers<[1], [0], [0], [1], [0, 0, 1, 1], [], []>} : vector<48x24xbf16>, vector<24x128xbf16>, vector<48x128xf32> -> vector<48x128xf32>
    %cst_3 = arith.constant 0.000000e+00 : f32
    %3 = vector.broadcast %cst_3 : f32 to vector<48x128xf32>
    %4 = arith.maximumf %2, %3 : vector<48x128xf32>
    %c0_4 = arith.constant 0 : index
    %c0_5 = arith.constant 0 : index
    %5 = vector.load %arg3[%c0_4, %c0_5] : memref<48x48xbf16, #tpu.memory_space<vmem>>, vector<48x48xbf16>
    %6 = arith.truncf %4 : vector<48x128xf32> to vector<48x128xbf16>
    %cst_6 = arith.constant dense<0.000000e+00> : vector<48x128xf32>
    %7 = tpu.matmul %5, %6, %cst_6 {dimension_numbers = #tpu.dot_dimension_numbers<[1], [0], [0], [1], [0, 0, 1, 1], [], []>} : vector<48x48xbf16>, vector<48x128xbf16>, vector<48x128xf32> -> vector<48x128xf32>
    %cst_7 = arith.constant 0.000000e+00 : f32
    %8 = vector.broadcast %cst_7 : f32 to vector<48x128xf32>
    %9 = arith.maximumf %7, %8 : vector<48x128xf32>
    %c0_8 = arith.constant 0 : index
    %c0_9 = arith.constant 0 : index
    %10 = vector.load %arg4[%c0_8, %c0_9] : memref<48x1xf32, #tpu.memory_space<vmem>>, vector<48x1xf32>
    %11 = vector.broadcast %10 : vector<48x1xf32> to vector<48x128xf32>
    %12 = arith.mulf %9, %11 : vector<48x128xf32>
    %cst_10 = arith.constant dense<0.000000e+00> : vector<128xf32>
    %13 = vector.multi_reduction <add>, %12, %cst_10 [0] : vector<48x128xf32> to vector<128xf32>
    %14 = vector.shape_cast %13 : vector<128xf32> to vector<1x128xf32>
    %c0_11 = arith.constant 0 : index
    %c0_12 = arith.constant 0 : index
    %c0_13 = arith.constant 0 : index
    %15 = vector.load %arg5[%c0_11, %c0_12, %c0_13] : memref<1x1x128xf32, #tpu.memory_space<vmem>>, vector<1x1x128xf32>
    %16 = vector.shape_cast %15 : vector<1x1x128xf32> to vector<1x128xf32>
    %17 = vector.shape_cast %14 : vector<1x128xf32> to vector<1x1x128xf32>
    tpu.vector_store %arg5[%c0_11, %c0_12, %c0_13], %17 {strides = array<i32>} : memref<1x1x128xf32, #tpu.memory_space<vmem>>, vector<1x1x128xf32>,
    return
  }
  func.func @transform_0(%arg0: i32) -> (i32, i32) {
    %c0_i32 = arith.constant 0 : i32
    %c0_i32_0 = arith.constant 0 : i32
    return %c0_i32, %arg0 : i32, i32
  }
  func.func @transform_1(%arg0: i32) -> (i32, i32) {
    %c0_i32 = arith.constant 0 : i32
    %c0_i32_0 = arith.constant 0 : i32
    %c0_i32_1 = arith.constant 0 : i32
    return %c0_i32, %c0_i32_0 : i32, i32
  }
  func.func @transform_2(%arg0: i32) -> (i32, i32) {
    %c0_i32 = arith.constant 0 : i32
    %c0_i32_0 = arith.constant 0 : i32
    %c0_i32_1 = arith.constant 0 : i32
    return %c0_i32, %c0_i32_0 : i32, i32
  }
  func.func @transform_3(%arg0: i32) -> (i32, i32) {
    %c0_i32 = arith.constant 0 : i32
    %c0_i32_0 = arith.constant 0 : i32
    %c0_i32_1 = arith.constant 0 : i32
    return %c0_i32, %c0_i32_0 : i32, i32
  }
  func.func @transform_4(%arg0: i32) -> (i32, i32, i32) {
    %c0_i32 = arith.constant 0 : i32
    %c0_i32_0 = arith.constant 0 : i32
    %c0_i32_1 = arith.constant 0 : i32
    return %arg0, %c0_i32, %c0_i32_0 : i32, i32, i32
  }
}

</mosaic_0001>

<llo_original>
// kernel: critic_fnn_forward.1
$region0: #{critic_fnn_forward.1}
  #allocation0 [shape = 'u32[]', space=smem, size = 0x4, offset = 0x4, fixed_abs, tag = 'smem constant byte address 0x4 - core index']
  #allocation1 [shape = 'u32[72,128]{1,0:T(1,128)}', space=vmem, size = 0x9000, scoped, tag = 'internal scratch']
  %s0 = inlined_call_operand.vmem [shape: bf16[24,128], index: 0, kind: input, shape index: {}]
  %s1 = inlined_call_operand.hbm [shape: bf16[48,24], index: 1, kind: input, shape index: {}]
  %s2 = inlined_call_operand.hbm [shape: bf16[48,48], index: 2, kind: input, shape index: {}]
  %s3 = inlined_call_operand.vmem [shape: f32[48,1], index: 3, kind: input, shape index: {}]
  %s4 = inlined_call_operand.vmem [shape: f32[1,1,128], index: 4, kind: output, shape index: {}]
  %s5 = sld [smem:[#allocation0]]
  $region34: #{critic_fnn_forward.1} parent=0
    _
  %s7 = ssub.s32 1, %s5
  %s8 = scalar_select 0, %s7, %s5
  $region1: #{critic_fnn_forward.1} parent=0
    #allocation2 [shape = 'u8[12288]{0}', space=vmem, size = 0x3000, scoped, tag = 'input window, operand 1, single buffered']
    #allocation3 [shape = 's32[1]{0}', space=sflag, size = 0x4, scoped, tag = 'scoped memory for critic_fnn_forward.1']
    #allocation4 [shape = 'u8[12288]{0}', space=vmem, size = 0x3000, scoped, tag = 'input window, operand 2, single buffered']
    #allocation5 [shape = 's32[1]{0}', space=sflag, size = 0x4, scoped, tag = 'scoped memory for critic_fnn_forward.1']
    %9 = vsyncpa [#allocation3], 0
    %10 = vsyncpa [#allocation5], 0
    // Predicated region
    $region2: #{critic_fnn_forward.1} parent=1 // pred_check
      _
    $region3: #{critic_fnn_forward.1} parent=1 // pred_check_branch
      %12 = sbr.rel (0) target = $region5
    $region4: #{critic_fnn_forward.1} parent=1 // pred_region
      _
    $region5: #{critic_fnn_forward.1} parent=1 // pred_fallthru
      _
    // Predicated region
    $region6: #{critic_fnn_forward.1} parent=1 // pred_check
      _
    $region7: #{critic_fnn_forward.1} parent=1 // pred_check_branch
      %14 = sbr.rel (0) target = $region9
    $region8: #{critic_fnn_forward.1} parent=1 // pred_region
      %16 = vsyncadd [#allocation3], 0
      %s17 = sshll.u32 %s1, 4
      %s18 = int_to_ptr.hbm [resolvable:$true] %s17
      %s19 = sshll.u32 [#allocation2], 4
      %s20 = int_to_ptr.vmem [resolvable:$true] %s19
      %25 = dma.hbm_to_vmem [thread:$0]  %s18, 384, %s20, [#allocation3], 64, 64, 4
    $region9: #{critic_fnn_forward.1} parent=1 // pred_fallthru
      _
    // Predicated region
    $region10: #{critic_fnn_forward.1} parent=1 // pred_check
      _
    $region11: #{critic_fnn_forward.1} parent=1 // pred_check_branch
      %27 = sbr.rel (0) target = $region13
    $region12: #{critic_fnn_forward.1} parent=1 // pred_region
      %29 = vsyncadd [#allocation5], 0
      %s30 = sshll.u32 %s2, 4
      %s31 = int_to_ptr.hbm [resolvable:$true] %s30
      %s32 = sshll.u32 [#allocation4], 4
      %s33 = int_to_ptr.vmem [resolvable:$true] %s32
      %38 = dma.hbm_to_vmem [thread:$0]  %s31, 384, %s33, [#allocation5], 64, 64, 4
    $region13: #{critic_fnn_forward.1} parent=1 // pred_fallthru
      _
    // Predicated region
    $region14: #{critic_fnn_forward.1} parent=1 // pred_check
      _
    $region15: #{critic_fnn_forward.1} parent=1 // pred_check_branch
      %40 = sbr.rel (0) target = $region17
    $region16: #{critic_fnn_forward.1} parent=1 // pred_region
      _
    $region17: #{critic_fnn_forward.1} parent=1 // pred_fallthru
      _
    // Predicated region
    $region18: #{critic_fnn_forward.1} parent=1 // pred_check
      _
    $region19: #{critic_fnn_forward.1} parent=1 // pred_check_branch
      %42 = sbr.rel (0) target = $region21
    $region20: #{critic_fnn_forward.1} parent=1 // pred_region
      %44 = dma.done [#allocation3], 384
    $region21: #{critic_fnn_forward.1} parent=1 // pred_fallthru
      _
    // Predicated region
    $region22: #{critic_fnn_forward.1} parent=1 // pred_check
      _
    $region23: #{critic_fnn_forward.1} parent=1 // pred_check_branch
      %46 = sbr.rel (0) target = $region25
    $region24: #{critic_fnn_forward.1} parent=1 // pred_region
      %48 = dma.done [#allocation5], 384
    $region25: #{critic_fnn_forward.1} parent=1 // pred_fallthru
      _
    %v50 = vld [vmem:[#allocation2] sm:$0xf]
    %v51 = vld [vmem:[#allocation2 + $0x4] sm:$0xf]
    %v52 = vld [vmem:[#allocation2 + $0x8] sm:$0xf]
    %v53 = vld [vmem:[#allocation2 + $0xc] sm:$0xf]
    %v54 = vld [vmem:[#allocation2 + $0x10] sm:$0xf]
    %v55 = vld [vmem:[#allocation2 + $0x14] sm:$0xf]
    %v56 = vld [vmem:[%s0] sm:$0xf]
    %v57 = vld [vmem:[%s0 + $0x4] sm:$0xf]
    %v58 = vld [vmem:[%s0 + $0x8] sm:$0xf]
    %v65 = vunpack.c.l.b16 %v50
    %v66 = vunpack.c.l.b16 %v51
    %v67 = vunpack.c.l.b16 %v52
    %v68 = vunpack.c.l.b16 %v53
    %v69 = vunpack.c.l.b16 %v54
    %v70 = vunpack.c.l.b16 %v55
    %v71 = vpack.c.b16 %v66, %v65
    %v72 = vpack.c.b16 %v68, %v67
    %v73 = vpack.c.b16 %v70, %v69
    %v77 = vunpack.c.l.b16 %v56
    %v78 = vunpack.c.l.b16 %v57
    %v79 = vunpack.c.l.b16 %v58
    %v80 = vpack.c.b16 %v78, %v77
    %v81 = vpack.c.b16 %v79, %v79
    %vm83 = vcmask 195584
    %v85 = vsel %vm83, %v71, 0
    %v88 = vsel %vm83, %v72, 0
    %v91 = vsel %vm83, %v73, 0
    %vm93 = vcmask 1043456
    %v95 = vsel %vm93, %v81, 0
    %97 = vmatpush.bf16.msra.mxu0 0
    %98 = vmatpush.bf16.msra.mxu0 0
    %99 = vmatpush.bf16.msra.mxu0 0
    %100 = vmatpush.bf16.msra.mxu0 0
    %101 = vmatpush.bf16.msra.mxu0 0
    %102 = vmatpush.bf16.msra.mxu0 0
    %103 = vmatpush.bf16.msra.mxu0 %v95
    %104 = vmatpush.bf16.msra.mxu0 %v80
    %105 = vmatmul.bf16.gmra.mxu0 %v85
    %v106 = vpop.f32.mrf.mxu0
    %v107 = vadd.f32 0.0, %v106
    %v108 = vpop.f32.mrf.mxu0
    %v109 = vadd.f32 0.0, %v108
    %110 = vmatmul.bf16.gmra.mxu0 %v88
    %v111 = vpop.f32.mrf.mxu0
    %v112 = vadd.f32 0.0, %v111
    %v113 = vpop.f32.mrf.mxu0
    %v114 = vadd.f32 0.0, %v113
    %115 = vmatmul.bf16.gmra.mxu0 %v91
    %v116 = vpop.f32.mrf.mxu0
    %v117 = vadd.f32 0.0, %v116
    %v118 = vpop.f32.mrf.mxu0
    %v119 = vadd.f32 0.0, %v118
    %120 = vdwg.mxu0
    %v121 = vmax.f32 %v107, 0.0
    %v122 = vmax.f32 %v109, 0.0
    %v123 = vmax.f32 %v112, 0.0
    %v124 = vmax.f32 %v114, 0.0
    %v125 = vmax.f32 %v117, 0.0
    %v126 = vmax.f32 %v119, 0.0
    %v127 = vld [vmem:[#allocation4] sm:$0xf]
    %v128 = vld [vmem:[#allocation4 + $0x4] sm:$0xf]
    %v129 = vld [vmem:[#allocation4 + $0x8] sm:$0xf]
    %v130 = vld [vmem:[#allocation4 + $0xc] sm:$0xf]
    %v131 = vld [vmem:[#allocation4 + $0x10] sm:$0xf]
    %v132 = vld [vmem:[#allocation4 + $0x14] sm:$0xf]
    %v133 = vpack.c.bf16 %v122, %v121
    %v134 = vpack.c.bf16 %v124, %v123
    %v135 = vpack.c.bf16 %v126, %v125
    %v142 = vunpack.c.l.b16 %v127
    %v143 = vunpack.c.l.b16 %v128
    %v144 = vunpack.c.l.b16 %v129
    %v145 = vunpack.c.l.b16 %v130
    %v146 = vunpack.c.l.b16 %v131
    %v147 = vunpack.c.l.b16 %v132
    %v148 = vpack.c.b16 %v143, %v142
    %v149 = vpack.c.b16 %v145, %v144
    %v150 = vpack.c.b16 %v147, %v146
    %vm151 = vcmask 392192
    %v153 = vsel %vm151, %v148, 0
    %v156 = vsel %vm151, %v149, 0
    %v159 = vsel %vm151, %v150, 0
    %161 = vmatpush.bf16.msra.mxu0 0
    %162 = vmatpush.bf16.msra.mxu0 0
    %163 = vmatpush.bf16.msra.mxu0 0
    %164 = vmatpush.bf16.msra.mxu0 0
    %165 = vmatpush.bf16.msra.mxu0 0
    %166 = vmatpush.bf16.msra.mxu0 %v135
    %167 = vmatpush.bf16.msra.mxu0 %v134
    %168 = vmatpush.bf16.msra.mxu0 %v133
    %169 = vmatmul.bf16.gmra.mxu0 %v153
    %v170 = vpop.f32.mrf.mxu0
    %v171 = vadd.f32 0.0, %v170
    %v172 = vpop.f32.mrf.mxu0
    %v173 = vadd.f32 0.0, %v172
    %174 = vmatmul.bf16.gmra.mxu0 %v156
    %v175 = vpop.f32.mrf.mxu0
    %v176 = vadd.f32 0.0, %v175
    %v177 = vpop.f32.mrf.mxu0
    %v178 = vadd.f32 0.0, %v177
    %179 = vmatmul.bf16.gmra.mxu0 %v159
    %v180 = vpop.f32.mrf.mxu0
    %v181 = vadd.f32 0.0, %v180
    %v182 = vpop.f32.mrf.mxu0
    %v183 = vadd.f32 0.0, %v182
    %184 = vdwg.mxu0
    %v185 = vmax.f32 %v171, 0.0
    %v186 = vmax.f32 %v173, 0.0
    %v187 = vmax.f32 %v176, 0.0
    %v188 = vmax.f32 %v178, 0.0
    %v189 = vmax.f32 %v181, 0.0
    %v190 = vmax.f32 %v183, 0.0
    %v191 = vld [vmem:[%s3] sm:$0xff]
    %v192 = vld [vmem:[%s3 + $0x8] sm:$0xff]
    %v193 = vld [vmem:[%s3 + $0x10] sm:$0xff]
    %v194 = vld [vmem:[%s3 + $0x18] sm:$0xff]
    %v195 = vld [vmem:[%s3 + $0x20] sm:$0xff]
    %v196 = vld [vmem:[%s3 + $0x28] sm:$0xff]
    %198 = vset.pattern.permute.xlu0 0
    %199 = vperm.xlu0 %198, %v191
    %v200 = vpop.permute.xlu0 %199
    %203 = vset.pattern.permute.xlu0 0
    %204 = vperm.xlu0 %203, %v192
    %v205 = vpop.permute.xlu0 %204
    %208 = vset.pattern.permute.xlu0 0
    %209 = vperm.xlu0 %208, %v193
    %v210 = vpop.permute.xlu0 %209
    %213 = vset.pattern.permute.xlu0 0
    %214 = vperm.xlu0 %213, %v194
    %v215 = vpop.permute.xlu0 %214
    %218 = vset.pattern.permute.xlu0 0
    %219 = vperm.xlu0 %218, %v195
    %v220 = vpop.permute.xlu0 %219
    %223 = vset.pattern.permute.xlu0 0
    %224 = vperm.xlu0 %223, %v196
    %v225 = vpop.permute.xlu0 %224
    %v227 = vmul.f32 %v185, %v200
    %v228 = vmul.f32 %v186, %v205
    %v229 = vmul.f32 %v187, %v210
    %v230 = vmul.f32 %v188, %v215
    %v231 = vmul.f32 %v189, %v220
    %v232 = vmul.f32 %v190, %v225
    %v233 = vadd.f32 %v227, %v228
    %v234 = vadd.f32 %v233, %v229
    %v235 = vadd.f32 %v234, %v230
    %v236 = vadd.f32 %v235, %v231
    %v237 = vadd.f32 %v236, %v232
    %v238 = vrot.slane %v237, 4
    %v239 = vadd.f32 %v237, %v238
    %v240 = vrot.slane %v239, 2
    %v241 = vadd.f32 %v239, %v240
    %v242 = vrot.slane %v241, 1
    %v243 = vadd.f32 %v241, %v242
    %244 = vst [vmem:[%s4] sm:$0x1] %v243
    // Predicated region
    $region26: #{critic_fnn_forward.1} parent=1 // pred_check
      _
    $region27: #{critic_fnn_forward.1} parent=1 // pred_check_branch
      %246 = sbr.rel (0) target = $region29
    $region28: #{critic_fnn_forward.1} parent=1 // pred_region
      _
    $region29: #{critic_fnn_forward.1} parent=1 // pred_fallthru
      _
    // Predicated region
    $region30: #{critic_fnn_forward.1} parent=1 // pred_check
      _
    $region31: #{critic_fnn_forward.1} parent=1 // pred_check_branch
      %248 = sbr.rel (0) target = $region33
    $region32: #{critic_fnn_forward.1} parent=1 // pred_region
      _
    $region33: #{critic_fnn_forward.1} parent=1 // pred_fallthru
      _
    %249 = vsyncpa [#allocation3], 1
    %250 = vsyncpa [#allocation5], 1

</llo_original>
